<compile_context>
chip_gen: v6e
topology: v6e:2x2x1
jax: 0.10.0
libtpu: 0.0.40
codegen_flags: <defaults>
</compile_context>

<pallas_src>
import jax
import jax.numpy as jnp
from jax.experimental import pallas as pl
from jax.experimental.pallas import tpu as pltpu


def _conf_kernel(logits_ref, conf_ref):
    # logits_ref: (tm, C) tile in the caller's native dtype (bf16 stays bf16 in HBM; upcast here).
    x = logits_ref[...].astype(jnp.float32)
    m = jnp.max(x, axis=1, keepdims=True)                  # (tm, 1)  XLU lane-reduce
    s = jnp.sum(jnp.exp(x - m), axis=1, keepdims=True)     # (tm, 1)  EUP exp + XLU lane-reduce
    # max(softmax(x)) == exp(max - max) / sum(exp(x - max)) == 1/s  -> no second max reduce.
    conf_ref[...] = pl.reciprocal(s, approx=False)


def _rank_loss_kernel(conf_ref, conf_roll_ref, c1_ref, c2_ref, loss_ref):
    # All inputs are (1, N): batch mapped onto lanes (lane-dense epilogue).
    conf = conf_ref[...]
    conf_roll = conf_roll_ref[...]
    c1 = c1_ref[...]
    c2 = c2_ref[...]
    rank_target = jnp.sign(c1 - c2)                        # {+1, 0, -1}
    rank_margin = jnp.abs(c1 - c2)
    # margin == 0 exactly where target == 0, so margin/(target+1e-7) stays finite (== 0 there).
    conf_roll = conf_roll + rank_margin / (rank_target + 1e-7)
    # MarginRankingLoss(margin=0, reduction='mean'): mean(max(0, -t*(x1-x2)))
    loss = jnp.mean(jnp.maximum(0.0, -rank_target * (conf - conf_roll)))
    loss_ref[0, 0] = loss


def _pick_batch_tile(n_rows, n_cols, in_bytes):
    """Largest batch tile that divides N and keeps (double-buffered input + f32 working copy)
    comfortably inside the scoped-VMEM budget (safe down to v5e's 16 MiB default and on
    v7x's 64 MiB physical VMEM)."""
    budget = 8 * 1024 * 1024
    for tm in (1024, 512, 256, 128, 64, 32, 16, 8):
        if n_rows % tm == 0 and tm * n_cols * (2 * in_bytes + 4) <= budget:
            return tm
    return n_rows  # small / odd batch: single full-extent block (legal per the (8,128) rule)


def crl_criterion(output, image_idx, correctness, max_correctness):
    """output: [N, C] logits (native dtype; bf16 ok); image_idx: [N] int32 indices into the
    History `correctness` buffer; correctness: [num_samples] float cumulative correct counts;
    max_correctness: python float."""
    N, C = output.shape
    tm = _pick_batch_tile(N, C, output.dtype.itemsize)

    # --- Kernel A: per-sample max-softmax confidence, tiled over the batch. ---
    conf = pl.pallas_call(
        _conf_kernel,
        out_shape=jax.ShapeDtypeStruct((N, 1), jnp.float32),
        grid=(N // tm,),
        in_specs=[pl.BlockSpec((tm, C), lambda i: (i, 0))],
        out_specs=pl.BlockSpec((tm, 1), lambda i: (i, 0)),
        compiler_params=pltpu.CompilerParams(
            dimension_semantics=("parallel",),
            vmem_limit_bytes=32 * 1024 * 1024,
        ),
    )(output)  # no wrapper-side f32 upcast: HBM->VMEM moves native-width bytes

    # --- Glue: single History gather + batch-wise rolls (O(N) data movement only).
    # TODO(synk): the stateful History (correct_log) gather correctness[image_idx] is a
    # data-dependent HBM gather and stays in JAX glue.
    conf_2d = conf.reshape(1, N)
    conf_roll = jnp.roll(conf_2d, -1, axis=1)              # torch.roll(conf, -1)
    c1 = (jnp.take(correctness, image_idx, axis=0).astype(jnp.float32)
          / float(max_correctness)).reshape(1, N)
    c2 = jnp.roll(c1, -1, axis=1)                          # == correctness[roll(image_idx,-1)]/max

    # --- Kernel B: ranking-loss epilogue on lane-dense (1, N) operands. ---
    loss = pl.pallas_call(
        _rank_loss_kernel,
        out_shape=jax.ShapeDtypeStruct((1, 1), jnp.float32),
        in_specs=[pl.BlockSpec(memory_space=pltpu.MemorySpace.VMEM)] * 4,
        out_specs=pl.BlockSpec(memory_space=pltpu.MemorySpace.VMEM),
    )(conf_2d, conf_roll, c1, c2)
    return loss[0, 0]


def _reference(output, image_idx, correctness, max_correctness):
    p = jax.nn.softmax(output.astype(jnp.float32), axis=1)
    conf = jnp.max(p, axis=1)
    conf_roll = jnp.roll(conf, -1)
    idx_roll = jnp.roll(image_idx, -1)
    c1 = correctness[image_idx] / max_correctness
    c2 = correctness[idx_roll] / max_correctness
    target = jnp.sign(c1 - c2)
    margin = jnp.abs(c1 - c2)
    conf_roll = conf_roll + margin / (target + 1e-7)
    return jnp.mean(jnp.maximum(0.0, -target * (conf - conf_roll)))


if __name__ == "__main__":
    key = jax.random.PRNGKey(0)
    k1, k2, k3 = jax.random.split(key, 3)

    N, C, NUM_SAMPLES = 8, 32, 64           # batch, num classes, dataset size for History
    output = jax.random.normal(k1, (N, C), dtype=jnp.float32)
    image_idx = jax.random.permutation(k2, NUM_SAMPLES)[:N].astype(jnp.int32)
    # Deterministic stand-in for the History (correct_log) state:
    correctness = jax.random.randint(k3, (NUM_SAMPLES,), 0, 6).astype(jnp.float32)
    max_correctness = 5.0

    loss = crl_criterion(output, image_idx, correctness, max_correctness)
    loss = jax.block_until_ready(loss)

    ref = _reference(output, image_idx, correctness, max_correctness)
    assert jnp.allclose(loss, ref, rtol=1e-5, atol=1e-6), (loss, ref)
    print("KERNEL_OK")
</pallas_src>

<mosaic_0001>
module attributes {stable_mosaic.version = 11 : i64} {
  func.func @_conf_kernel(%arg0: i32, %arg1: memref<8x32xf32, #tpu.memory_space<vmem>>, %arg2: memref<8x1xf32, #tpu.memory_space<vmem>>) attributes {dimension_semantics = [#tpu.dimension_semantics<parallel>], iteration_bounds = array<i64: 1>, scalar_prefetch = 0 : i64, scratch_operands = 0 : i64, tpu.core_type = #tpu.core_type<tc>, window_params = [{transform_indices = @transform_0, window_bounds = array<i64: 8, 32>}, {transform_indices = @transform_1, window_bounds = array<i64: 8, 1>}]} {
    %c0 = arith.constant 0 : index
    %c0_0 = arith.constant 0 : index
    %0 = vector.load %arg1[%c0, %c0_0] : memref<8x32xf32, #tpu.memory_space<vmem>>, vector<8x32xf32>
    %cst = arith.constant dense<0xFF800000> : vector<8xf32>
    %1 = vector.multi_reduction <maximumf>, %0, %cst [1] : vector<8x32xf32> to vector<8xf32>
    %2 = vector.shape_cast %1 : vector<8xf32> to vector<8x1xf32>
    %3 = vector.broadcast %2 : vector<8x1xf32> to vector<8x32xf32>
    %4 = arith.subf %0, %3 : vector<8x32xf32>
    %5 = math.exp %4 : vector<8x32xf32>
    %cst_1 = arith.constant dense<0.000000e+00> : vector<8xf32>
    %6 = vector.multi_reduction <add>, %5, %cst_1 [1] : vector<8x32xf32> to vector<8xf32>
    %7 = vector.shape_cast %6 : vector<8xf32> to vector<8x1xf32>
    %8 = tpu.reciprocal %7 : vector<8x1xf32> -> vector<8x1xf32>
    %c0_2 = arith.constant 0 : index
    %c0_3 = arith.constant 0 : index
    %9 = vector.load %arg2[%c0_2, %c0_3] : memref<8x1xf32, #tpu.memory_space<vmem>>, vector<8x1xf32>
    tpu.vector_store %arg2[%c0_2, %c0_3], %8 {strides = array<i32>} : memref<8x1xf32, #tpu.memory_space<vmem>>, vector<8x1xf32>,
    return
  }
  func.func @transform_0(%arg0: i32) -> (i32, i32) {
    %c0_i32 = arith.constant 0 : i32
    %c0_i32_0 = arith.constant 0 : i32
    return %arg0, %c0_i32 : i32, i32
  }
  func.func @transform_1(%arg0: i32) -> (i32, i32) {
    %c0_i32 = arith.constant 0 : i32
    %c0_i32_0 = arith.constant 0 : i32
    return %arg0, %c0_i32 : i32, i32
  }
}

</mosaic_0001>

<llo_original>
// kernel: tpu_custom_call.1
$region0: #{tpu_custom_call.1}
  #allocation0 [shape = 'u32[]', space=smem, size = 0x4, offset = 0x4, fixed_abs, tag = 'smem constant byte address 0x4 - core index']
  #allocation1 [shape = 'u32[144,128]{1,0:T(1,128)}', space=vmem, size = 0x12000, scoped, tag = 'internal scratch']
  %s0 = inlined_call_operand.hbm [shape: f32[8,32], index: 0, kind: input, shape index: {}]
  %s1 = inlined_call_operand.vmem [shape: f32[8,1], index: 1, kind: output, shape index: {}]
  %s2 = sld [smem:[#allocation0]]
  $region18: #{tpu_custom_call.1} parent=0
    _
  %s4 = ssub.s32 1, %s2
  %s5 = scalar_select 0, %s4, %s2
  $region1: #{tpu_custom_call.1} parent=0
    #allocation2 [shape = 'u8[4096]{0}', space=vmem, size = 0x1000, scoped, tag = 'input window, operand 0, single buffered']
    #allocation3 [shape = 's32[1]{0}', space=sflag, size = 0x4, scoped, tag = 'scoped memory for tpu_custom_call.1']
    %6 = vsyncpa [#allocation3], 0
    // Predicated region
    $region2: #{tpu_custom_call.1} parent=1 // pred_check
      _
    $region3: #{tpu_custom_call.1} parent=1 // pred_check_branch
      %8 = sbr.rel (0) target = $region5
    $region4: #{tpu_custom_call.1} parent=1 // pred_region
      %s10 = ssub.s32 128, 128
      %11 = vsyncadd [#allocation3], %s10
      %s13 = sshll.u32 [#allocation2], 4
      %s14 = int_to_ptr.vmem [resolvable:$true] %s13
      %16 = dma.hbm_to_vmem [thread:$0]  %s0, 128, %s14, [#allocation3]
    $region5: #{tpu_custom_call.1} parent=1 // pred_fallthru
      _
    // Predicated region
    $region6: #{tpu_custom_call.1} parent=1 // pred_check
      _
    $region7: #{tpu_custom_call.1} parent=1 // pred_check_branch
      %18 = sbr.rel (0) target = $region9
    $region8: #{tpu_custom_call.1} parent=1 // pred_region
      %19 = dma.done [#allocation3], 128
    $region9: #{tpu_custom_call.1} parent=1 // pred_fallthru
      _
    %v20 = vld [vmem:[#allocation2] sm:$0xff]
    %vm21 = vcmask 261120
    %v22 = vsel %vm21, %v20, -inf
    %23 = vmax.xlane.f32.xlu0 %v22
    %v24 = vpop.xlane.xlu0 %23
    %v25 = vsub.f32 %v20, %v24
    %v26 = vmul.f32 %v25, 1.442695
    %v27 = vpow.pop %v26
    %v28 = vsel %vm21, %v27, 0.0
    %29 = vadd.xlane.f32.xlu0 %v28
    %v30 = vpop.xlane.xlu0 %29
    %v31 = vrcp.pop %v30
    %vm32 = vcmask 7168
    %33 = vst.msk [vmem:[%s1] sm:$0xff] %vm32, %v31
    // Predicated region
    $region10: #{tpu_custom_call.1} parent=1 // pred_check
      _
    $region11: #{tpu_custom_call.1} parent=1 // pred_check_branch
      %35 = sbr.rel (0) target = $region13
    $region12: #{tpu_custom_call.1} parent=1 // pred_region
      _
    $region13: #{tpu_custom_call.1} parent=1 // pred_fallthru
      _
    // Predicated region
    $region14: #{tpu_custom_call.1} parent=1 // pred_check
      _
    $region15: #{tpu_custom_call.1} parent=1 // pred_check_branch
      %37 = sbr.rel (0) target = $region17
    $region16: #{tpu_custom_call.1} parent=1 // pred_region
      _
    $region17: #{tpu_custom_call.1} parent=1 // pred_fallthru
      _
    %38 = vsyncpa [#allocation3], 1

</llo_original>
